<compile_context>
chip_gen: v5e
topology: v5e:2x2
jax: 0.10.0
libtpu: 0.0.40
codegen_flags: <defaults>
</compile_context>

<pallas_src>
import math

import jax
import jax.numpy as jnp
from jax.experimental import pallas as pl
from jax.experimental.pallas import tpu as pltpu


def reshape_flatten(x: jax.Array, *, materialize: bool = False) -> jax.Array:
    """Equivalent of `x.view(x.shape[0], -1)`.

    materialize=False (default): metadata-only reshape, zero cost.
    materialize=True: force a fresh HBM buffer via a Pallas HBM->HBM DMA copy
    (fusion anchor / explicit materialization).
    """
    B = x.shape[0]
    F = math.prod(x.shape[1:]) if len(x.shape) > 1 else 1

    # Metadata-only flatten; for a contiguous array this is free in XLA.
    x2 = x.reshape(B, F)
    if not materialize:
        return x2

    # --- Forced materialization: direct HBM->HBM DMA copy. ---
    # Split along B into contiguous row-chunks so v7x's two TensorCores can
    # each issue their own DMAs ("parallel" grid axis). Each chunk is a single
    # contiguous HBM range (row-major), i.e. one long descriptor.
    num_chunks = 2 if (B >= 2 and B % 2 == 0) else 1
    rows = B // num_chunks

    def _hbm_copy_kernel(x_hbm, o_hbm, sem):
        i = pl.program_id(0)
        start = pl.multiple_of(i * rows, rows)
        cp = pltpu.make_async_copy(
            x_hbm.at[pl.ds(start, rows)],
            o_hbm.at[pl.ds(start, rows)],
            sem,
        )
        cp.start()
        cp.wait()

    return pl.pallas_call(
        _hbm_copy_kernel,
        out_shape=jax.ShapeDtypeStruct((B, F), x.dtype),
        grid=(num_chunks,),
        in_specs=[pl.BlockSpec(memory_space=pl.ANY)],
        out_specs=pl.BlockSpec(memory_space=pl.ANY),
        scratch_shapes=[pltpu.SemaphoreType.DMA(())],
        compiler_params=pltpu.CompilerParams(
            dimension_semantics=("parallel",),
        ),
    )(x2)


if __name__ == "__main__":
    key = jax.random.PRNGKey(0)
    # Small NCHW shape consistent with the module's forward.
    B, C, H, W = 2, 4, 16, 16
    x = jax.random.normal(key, (B, C, H, W), dtype=jnp.float32)

    # Reference of torch's x.view(B, -1).
    ref = x.reshape(B, -1)

    # Default (recommended) path: metadata-only reshape, zero HBM traffic.
    out_view = jax.block_until_ready(reshape_flatten(x))
    assert out_view.shape == (B, C * H * W), out_view.shape
    assert jnp.array_equal(out_view, ref), "mismatch (metadata path)"

    # Forced-materialization path: exercises the Pallas HBM->HBM DMA kernel.
    out_mat = jax.block_until_ready(reshape_flatten(x, materialize=True))
    assert out_mat.shape == (B, C * H * W), out_mat.shape
    assert jnp.array_equal(out_mat, ref), "mismatch (Pallas DMA path)"

    print("KERNEL_OK")
</pallas_src>

<mosaic_0001>
module attributes {stable_mosaic.version = 11 : i64} {
  func.func @_hbm_copy_kernel(%arg0: i32, %arg1: memref<2x1024xf32, #tpu.memory_space<any>>, %arg2: memref<2x1024xf32, #tpu.memory_space<any>>, %arg3: memref<!tpu.dma_semaphore, #tpu.memory_space<semaphore_mem>>) attributes {dimension_semantics = [#tpu.dimension_semantics<parallel>], iteration_bounds = array<i64: 2>, scalar_prefetch = 0 : i64, scratch_operands = 1 : i64, tpu.core_type = #tpu.core_type<tc>, window_params = [{}, {}]} {
    %c1_i32 = arith.constant 1 : i32
    %0 = arith.muli %arg0, %c1_i32 : i32
    %1 = tpu.assume_multiple %0, 1 : i32
    %c0_i32 = arith.constant 0 : i32
    %2 = tpu.memref_slice %arg1[%1, %c0_i32] : memref<2x1024xf32, #tpu.memory_space<any>> -> memref<1x1024xf32, #tpu.memory_space<any>>
    %c0_i32_0 = arith.constant 0 : i32
    %3 = tpu.memref_slice %arg2[%1, %c0_i32_0] : memref<2x1024xf32, #tpu.memory_space<any>> -> memref<1x1024xf32, #tpu.memory_space<any>>
    tpu.enqueue_dma source(%2 : memref<1x1024xf32, #tpu.memory_space<any>>) target(%3 : memref<1x1024xf32, #tpu.memory_space<any>>) target_semaphore(%arg3 : memref<!tpu.dma_semaphore, #tpu.memory_space<semaphore_mem>>)
    %c0_i32_1 = arith.constant 0 : i32
    %4 = tpu.memref_slice %arg1[%1, %c0_i32_1] : memref<2x1024xf32, #tpu.memory_space<any>> -> memref<1x1024xf32, #tpu.memory_space<any>>
    %c0_i32_2 = arith.constant 0 : i32
    %5 = tpu.memref_slice %arg2[%1, %c0_i32_2] : memref<2x1024xf32, #tpu.memory_space<any>> -> memref<1x1024xf32, #tpu.memory_space<any>>
    tpu.wait_dma2 semaphore(%arg3 : memref<!tpu.dma_semaphore, #tpu.memory_space<semaphore_mem>>) src(%4 : memref<1x1024xf32, #tpu.memory_space<any>>) dst(%5 : memref<1x1024xf32, #tpu.memory_space<any>>)
    return
  }
}

</mosaic_0001>

<llo_original>
// kernel: tpu_custom_call.1
$region0: #{tpu_custom_call.1}
  #allocation0 [shape = 'u32[]', space=smem, size = 0x4, offset = 0x4, fixed_abs, tag = 'smem constant byte address 0x4 - core index']
  #allocation1 [shape = 'u32[72,128]{1,0:T(1,128)}', space=vmem, size = 0x9000, scoped, tag = 'internal scratch']
  #allocation2 [shape = 's32[1]{0}', space=sflag, size = 0x4, scoped, tag = 'scratch operand']
  #allocation3 [shape = 's32[]', space=sflag, size = 0x4, offset = 0, fixed_abs, tag = 'sflag constant byte address 0x0 - dummy sync flag']
  %s0 = inlined_call_operand.hbm [shape: f32[2,1024], index: 0, kind: input, shape index: {}]
  %s1 = inlined_call_operand.hbm [shape: f32[2,1024], index: 1, kind: output, shape index: {}]
  %s2 = sld [smem:[#allocation0]]
  $region9: #{tpu_custom_call.1} parent=0
    _
  %s4 = ssub.s32 1, %s2
  %s5 = scalar_select 0, %s4, %s2
  loop: start=0, step=1, limit=2
  $region2: #{tpu_custom_call.1} parent=0 // loop_pre_header
    _
  $region3: #{tpu_custom_call.1} parent=0 // loop_header
    %s7 = sphi 0, %s11
    %p8 = scmp.ge.s32.totalorder %s7, 2
  $region4: #{tpu_custom_call.1} parent=0 // loop_header_branch
    %10 = sbr.rel (%p8) target = $region8
  $region5: #{tpu_custom_call.1} parent=0 // loop_body
    #allocation4 [shape = 'u32[3]{0}', space=smem, size = 0xc, scoped, tag = 'DMA stride descriptor']
    %s12 = sadd.s32 %s7, 1
    %s13 = sshrl.u32 %s7, 1
    %s14 = sand.u32 %s7, 1
    %s15 = smul.u32 %s13, 16
    %s16 = sadd.s32 %s14, %s15
    %s17 = scalar_lea.hbm %s0, %s16
    %s18 = scalar_lea.hbm %s1, %s16
    %s20 = sshll.u32 1, 14
    %s21 = sxor.u32 4294967295, %s20
    %s23 = sshll.u32 %s17, 4
    %s24 = int_to_ptr.hbm [resolvable:$true] %s23
    %s25 = sshll.u32 %s18, 4
    %s26 = int_to_ptr.hbm [resolvable:$true] %s25
    %30 = sst [smem:[#allocation4]] 32
    %s31 = scalar_lea.smem [#allocation4], 1
    %32 = sst [smem:[%s31]] 32
    %s33 = scalar_lea.smem [#allocation4], 2
    %34 = sst [smem:[%s33]] 1
    %36 = dma.general %s24, 128, %s26, [#allocation2], [#allocation3], [#allocation4], 0, 0
    %s37 = smul.u32 1, 8
    %s38 = sshll.u32 %s37, 4
    %39 = dma.done [#allocation2], %s38
  $region6: #{tpu_custom_call.1} parent=0 // loop_footer
    %s11 = sadd.s32 1, %s7
  $region7: #{tpu_custom_call.1} parent=0 // loop_footer_branch
    %6 = sbr.rel target = $region3
  $region8: #{tpu_custom_call.1} parent=0 // loop_exit
    _
  %40 = vsyncmov [#allocation2]
  %s41 = vpop.sfrf %40
  %p42 = scmp.eq.s32.totalorder %s41, 0
  %p43 = pneg %p42
  %45 = shalt.err (%p43)

</llo_original>
